<compile_context>
chip_gen: v7x
topology: tpu7x:2x2x1
jax: 0.10.0
libtpu: 0.0.40
codegen_flags: <defaults>
</compile_context>

<pallas_src>
import functools

import jax
import jax.numpy as jnp
from jax.experimental import pallas as pl
from jax.experimental.pallas import tpu as pltpu


def _round_up(a, k):
    return ((a + k - 1) // k) * k


def _linear_kernel(x_ref, w_ref, b_ref, o_ref, *, out_size):
    # x: (tm, in), w: (in, n_pad) -> lane-dense MXU matmul with f32 accumulation.
    acc = jnp.dot(x_ref[...], w_ref[...], preferred_element_type=jnp.float32)
    # Drop the zero-padded lanes and store the narrow (tm, out_size) block.
    o_ref[...] = (acc[:, :out_size] + b_ref[...]).astype(o_ref.dtype)


def linear_regression_forward(x, w, b, *, compute_dtype=jnp.float32, tm_cap=2048):
    """out = flatten(x) @ w + b.

    x: any shape whose trailing elements flatten to input_size.
    w: [input_size, output_size]  (NOTE: transposed vs. PyTorch nn.Linear's
       [out, in] layout -- pass module.LR.weight.T).
    b: [output_size].
    compute_dtype: jnp.float32 or jnp.bfloat16 (x/W are cast; accumulation and
       the output stay float32).
    """
    in_size, out_size = w.shape
    assert b.shape == (out_size,), f"bias shape {b.shape} != ({out_size},)"
    assert x.size % in_size == 0, (
        f"x with {x.size} elements cannot flatten to [M, {in_size}]; "
        "was W passed in PyTorch's [out, in] orientation?")

    compute_dtype = jnp.dtype(compute_dtype)
    x2d = x.reshape(-1, in_size).astype(compute_dtype)
    m = x2d.shape[0]

    # Lane-dense matmul operand: zero-pad W's output dim to a multiple of 128.
    n_pad = _round_up(out_size, 128)
    w_p = jnp.zeros((in_size, n_pad), compute_dtype).at[:, :out_size].set(
        w.astype(compute_dtype))
    b_p = b.reshape(1, out_size).astype(jnp.float32)

    # M tile: sublane multiple (8 f32 / 16 bf16), capped at tm_cap, and chosen so
    # large m yields >= 2 grid steps (v7x 2-TC sharding of the parallel axis).
    mult = 16 if compute_dtype == jnp.bfloat16 else 8
    tm = min(_round_up(tm_cap, mult), max(mult, _round_up(pl.cdiv(m, 2), mult)))
    grid_m = pl.cdiv(m, tm)  # ragged last block: OOB reads unused, writes masked

    itemsize = compute_dtype.itemsize
    cost = pl.CostEstimate(
        flops=2 * m * in_size * n_pad,
        transcendentals=0,
        bytes_accessed=(m * in_size * itemsize        # x read
                        + m * out_size * 4            # out write
                        + in_size * n_pad * itemsize  # W read
                        + out_size * 4))              # b read

    kernel = functools.partial(_linear_kernel, out_size=out_size)
    return pl.pallas_call(
        kernel,
        out_shape=jax.ShapeDtypeStruct((m, out_size), jnp.float32),
        grid=(grid_m,),
        in_specs=[
            pl.BlockSpec((tm, in_size), lambda i: (i, 0)),     # x tile per step
            pl.BlockSpec((in_size, n_pad), lambda i: (0, 0)),  # W VMEM-resident
            pl.BlockSpec((1, out_size), lambda i: (0, 0)),     # b VMEM-resident
        ],
        out_specs=pl.BlockSpec((tm, out_size), lambda i: (i, 0)),
        compiler_params=pltpu.CompilerParams(
            dimension_semantics=("parallel",)),
        cost_estimate=cost,
    )(x2d, w_p, b_p)


def init_params(key, input_size, output_size):
    """Deterministic synthetic parameters (shapes match nn.Linear, transposed)."""
    kw, kb = jax.random.split(key)
    w = jax.random.normal(kw, (input_size, output_size), jnp.float32) * 0.05
    b = jax.random.normal(kb, (output_size,), jnp.float32) * 0.05
    return w, b


if __name__ == "__main__":
    INPUT_SIZE, OUTPUT_SIZE = 256, 10  # 1*16*16 -> 10, as in the Easy-MNIST config

    key = jax.random.PRNGKey(0)
    kx, kp, kx2 = jax.random.split(key, 3)
    w, b = init_params(kp, INPUT_SIZE, OUTPUT_SIZE)

    # --- f32 path: NCHW input as PyTorch would feed it, flattened in-wrapper ---
    x = jax.random.normal(kx, (8, 1, 16, 16), jnp.float32)
    out = jax.block_until_ready(linear_regression_forward(x, w, b))
    ref = x.reshape(-1, INPUT_SIZE) @ w + b
    assert out.shape == (8, OUTPUT_SIZE)
    assert jnp.allclose(out, ref, atol=1e-4, rtol=1e-4), "f32 path mismatch"

    # --- bf16 input path + ragged (non-tile-multiple) batch exercising the
    #     masked edge block ---
    x2 = jax.random.normal(kx2, (13, INPUT_SIZE), jnp.float32)
    out_bf = jax.block_until_ready(
        linear_regression_forward(x2, w, b, compute_dtype=jnp.bfloat16))
    ref_bf = (x2.astype(jnp.bfloat16).astype(jnp.float32)
              @ w.astype(jnp.bfloat16).astype(jnp.float32) + b)
    assert out_bf.shape == (13, OUTPUT_SIZE)
    assert jnp.allclose(out_bf, ref_bf, atol=1e-3, rtol=1e-3), "bf16 path mismatch"

    print("KERNEL_OK")
</pallas_src>

<mosaic_0001>
module attributes {stable_mosaic.version = 11 : i64} {
  func.func @_linear_kernel(%arg0: i32, %arg1: memref<8x256xf32, #tpu.memory_space<vmem>>, %arg2: memref<256x128xf32, #tpu.memory_space<vmem>>, %arg3: memref<1x10xf32, #tpu.memory_space<vmem>>, %arg4: memref<8x10xf32, #tpu.memory_space<vmem>>) attributes {dimension_semantics = [#tpu.dimension_semantics<parallel>], iteration_bounds = array<i64: 1>, scalar_prefetch = 0 : i64, scratch_operands = 0 : i64, tpu.core_type = #tpu.core_type<tc>, window_params = [{transform_indices = @transform_0, window_bounds = array<i64: 8, 256>}, {pipeline_mode = #tpu.pipeline_mode<synchronous>, transform_indices = @transform_1, window_bounds = array<i64: 256, 128>}, {pipeline_mode = #tpu.pipeline_mode<synchronous>, transform_indices = @transform_2, window_bounds = array<i64: 1, 10>}, {transform_indices = @transform_3, window_bounds = array<i64: 8, 10>}]} {
    %c0 = arith.constant 0 : index
    %c0_0 = arith.constant 0 : index
    %0 = vector.load %arg1[%c0, %c0_0] : memref<8x256xf32, #tpu.memory_space<vmem>>, vector<8x256xf32>
    %c0_1 = arith.constant 0 : index
    %c0_2 = arith.constant 0 : index
    %1 = vector.load %arg2[%c0_1, %c0_2] : memref<256x128xf32, #tpu.memory_space<vmem>>, vector<256x128xf32>
    %cst = arith.constant dense<0.000000e+00> : vector<8x128xf32>
    %2 = tpu.matmul %0, %1, %cst {dimension_numbers = #tpu.dot_dimension_numbers<[1], [0], [0], [1], [0, 0, 1, 1], [], []>} : vector<8x256xf32>, vector<256x128xf32>, vector<8x128xf32> -> vector<8x128xf32>
    %3 = vector.extract_strided_slice %2 {offsets = [0, 0], sizes = [8, 10], strides = [1, 1]} : vector<8x128xf32> to vector<8x10xf32>
    %c0_3 = arith.constant 0 : index
    %c0_4 = arith.constant 0 : index
    %4 = vector.load %arg3[%c0_3, %c0_4] : memref<1x10xf32, #tpu.memory_space<vmem>>, vector<1x10xf32>
    %5 = vector.broadcast %4 : vector<1x10xf32> to vector<8x10xf32>
    %6 = arith.addf %3, %5 : vector<8x10xf32>
    %c0_5 = arith.constant 0 : index
    %c0_6 = arith.constant 0 : index
    %7 = vector.load %arg4[%c0_5, %c0_6] : memref<8x10xf32, #tpu.memory_space<vmem>>, vector<8x10xf32>
    tpu.vector_store %arg4[%c0_5, %c0_6], %6 {strides = array<i32>} : memref<8x10xf32, #tpu.memory_space<vmem>>, vector<8x10xf32>,
    return
  }
  func.func @transform_0(%arg0: i32) -> (i32, i32) {
    %c0_i32 = arith.constant 0 : i32
    %c0_i32_0 = arith.constant 0 : i32
    return %arg0, %c0_i32 : i32, i32
  }
  func.func @transform_1(%arg0: i32) -> (i32, i32) {
    %c0_i32 = arith.constant 0 : i32
    %c0_i32_0 = arith.constant 0 : i32
    %c0_i32_1 = arith.constant 0 : i32
    return %c0_i32, %c0_i32_0 : i32, i32
  }
  func.func @transform_2(%arg0: i32) -> (i32, i32) {
    %c0_i32 = arith.constant 0 : i32
    %c0_i32_0 = arith.constant 0 : i32
    %c0_i32_1 = arith.constant 0 : i32
    return %c0_i32, %c0_i32_0 : i32, i32
  }
  func.func @transform_3(%arg0: i32) -> (i32, i32) {
    %c0_i32 = arith.constant 0 : i32
    %c0_i32_0 = arith.constant 0 : i32
    return %arg0, %c0_i32 : i32, i32
  }
}

</mosaic_0001>

<llo_original>
// kernel: tpu_custom_call.1
$region0: #{tpu_custom_call.1}
  #allocation0 [shape = 'u32[]', space=smem, size = 0x4, offset = 0x4, fixed_abs, tag = 'smem constant byte address 0x4 - core index']
  #allocation1 [shape = 'u32[144,128]{1,0:T(1,128)}', space=vmem, size = 0x12000, scoped, tag = 'internal scratch']
  %s0 = inlined_call_operand.hbm [shape: f32[8,256], index: 0, kind: input, shape index: {}]
  %s1 = inlined_call_operand.hbm [shape: f32[256,128], index: 1, kind: input, shape index: {}]
  %s2 = inlined_call_operand.vmem [shape: f32[1,10], index: 2, kind: input, shape index: {}]
  %s3 = inlined_call_operand.hbm [shape: f32[8,10], index: 3, kind: output, shape index: {}]
  %s4 = sld [smem:[#allocation0]]
  $region30: #{tpu_custom_call.1} parent=0
    _
  %s6 = ssub.s32 1, %s4
  %s7 = scalar_select 0, %s6, %s4
  $region1: #{tpu_custom_call.1} parent=0
    #allocation2 [shape = 'u8[8192]{0}', space=vmem, size = 0x2000, scoped, tag = 'input window, operand 0, single buffered']
    #allocation3 [shape = 's32[1]{0}', space=sflag, size = 0x4, scoped, tag = 'scoped memory for tpu_custom_call.1']
    #allocation4 [shape = 's32[1]{0}', space=sflag, size = 0x4, scoped, tag = 'scoped memory for tpu_custom_call.1']
    #allocation5 [shape = 'u8[131072]{0}', space=vmem, size = 0x20000, scoped, tag = 'input window, operand 1, single buffered']
    #allocation6 [shape = 's32[1]{0}', space=sflag, size = 0x4, scoped, tag = 'scoped memory for tpu_custom_call.1']
    #allocation7 [shape = 'u8[4096]{0}', space=vmem, size = 0x1000, scoped, tag = 'output window, operand 0, single buffered']
    %8 = vsyncpa [#allocation3], 0
    %9 = vsyncpa [#allocation6], 0
    %10 = vsyncpa [#allocation4], 0
    // Predicated region
    $region2: #{tpu_custom_call.1} parent=1 // pred_check
      _
    $region3: #{tpu_custom_call.1} parent=1 // pred_check_branch
      %12 = sbr.rel (0) target = $region5
    $region4: #{tpu_custom_call.1} parent=1 // pred_region
      %s14 = ssub.s32 256, 256
      %15 = vsyncadd [#allocation3], %s14
      %s17 = sshll.u32 [#allocation2], 4
      %s18 = int_to_ptr.vmem [resolvable:$true] %s17
      %20 = dma.hbm_to_vmem [thread:$0]  %s0, 256, %s18, [#allocation3]
    $region5: #{tpu_custom_call.1} parent=1 // pred_fallthru
      _
    // Predicated region
    $region6: #{tpu_custom_call.1} parent=1 // pred_check
      _
    $region7: #{tpu_custom_call.1} parent=1 // pred_check_branch
      %22 = sbr.rel (0) target = $region9
    $region8: #{tpu_custom_call.1} parent=1 // pred_region
      %s24 = ssub.s32 4096, 4096
      %25 = vsyncadd [#allocation6], %s24
      %s26 = sshll.u32 [#allocation5], 4
      %s27 = int_to_ptr.vmem [resolvable:$true] %s26
      %32 = dma.hbm_to_vmem [thread:$0]  %s1, 4096, %s27, [#allocation6], 128, 128, 8
    $region9: #{tpu_custom_call.1} parent=1 // pred_fallthru
      _
    // Predicated region
    $region10: #{tpu_custom_call.1} parent=1 // pred_check
      _
    $region11: #{tpu_custom_call.1} parent=1 // pred_check_branch
      %34 = sbr.rel (0) target = $region13
    $region12: #{tpu_custom_call.1} parent=1 // pred_region
      _
    $region13: #{tpu_custom_call.1} parent=1 // pred_fallthru
      _
    // Predicated region
    $region14: #{tpu_custom_call.1} parent=1 // pred_check
      _
    $region15: #{tpu_custom_call.1} parent=1 // pred_check_branch
      %36 = sbr.rel (0) target = $region17
    $region16: #{tpu_custom_call.1} parent=1 // pred_region
      %37 = dma.done [#allocation3], 256
    $region17: #{tpu_custom_call.1} parent=1 // pred_fallthru
      _
    // Predicated region
    $region18: #{tpu_custom_call.1} parent=1 // pred_check
      _
    $region19: #{tpu_custom_call.1} parent=1 // pred_check_branch
      %39 = sbr.rel (0) target = $region21
    $region20: #{tpu_custom_call.1} parent=1 // pred_region
      %40 = dma.done [#allocation6], 4096
    $region21: #{tpu_custom_call.1} parent=1 // pred_fallthru
      _
    %v41 = vld [vmem:[#allocation2] sm:$0xff]
    %v42 = vld [vmem:[#allocation2 + $0x8] sm:$0xff]
    %v43 = vld [vmem:[#allocation5] sm:$0xff]
    %v44 = vld [vmem:[#allocation5 + $0x8] sm:$0xff]
    %v45 = vld [vmem:[#allocation5 + $0x10] sm:$0xff]
    %v46 = vld [vmem:[#allocation5 + $0x18] sm:$0xff]
    %v47 = vld [vmem:[#allocation5 + $0x20] sm:$0xff]
    %v48 = vld [vmem:[#allocation5 + $0x28] sm:$0xff]
    %v49 = vld [vmem:[#allocation5 + $0x30] sm:$0xff]
    %v50 = vld [vmem:[#allocation5 + $0x38] sm:$0xff]
    %v51 = vld [vmem:[#allocation5 + $0x40] sm:$0xff]
    %v52 = vld [vmem:[#allocation5 + $0x48] sm:$0xff]
    %v53 = vld [vmem:[#allocation5 + $0x50] sm:$0xff]
    %v54 = vld [vmem:[#allocation5 + $0x58] sm:$0xff]
    %v55 = vld [vmem:[#allocation5 + $0x60] sm:$0xff]
    %v56 = vld [vmem:[#allocation5 + $0x68] sm:$0xff]
    %v57 = vld [vmem:[#allocation5 + $0x70] sm:$0xff]
    %v58 = vld [vmem:[#allocation5 + $0x78] sm:$0xff]
    %v59 = vld [vmem:[#allocation5 + $0x80] sm:$0xff]
    %v60 = vld [vmem:[#allocation5 + $0x88] sm:$0xff]
    %v61 = vld [vmem:[#allocation5 + $0x90] sm:$0xff]
    %v62 = vld [vmem:[#allocation5 + $0x98] sm:$0xff]
    %v63 = vld [vmem:[#allocation5 + $0xa0] sm:$0xff]
    %v64 = vld [vmem:[#allocation5 + $0xa8] sm:$0xff]
    %v65 = vld [vmem:[#allocation5 + $0xb0] sm:$0xff]
    %v66 = vld [vmem:[#allocation5 + $0xb8] sm:$0xff]
    %v67 = vld [vmem:[#allocation5 + $0xc0] sm:$0xff]
    %v68 = vld [vmem:[#allocation5 + $0xc8] sm:$0xff]
    %v69 = vld [vmem:[#allocation5 + $0xd0] sm:$0xff]
    %v70 = vld [vmem:[#allocation5 + $0xd8] sm:$0xff]
    %v71 = vld [vmem:[#allocation5 + $0xe0] sm:$0xff]
    %v72 = vld [vmem:[#allocation5 + $0xe8] sm:$0xff]
    %v73 = vld [vmem:[#allocation5 + $0xf0] sm:$0xff]
    %v74 = vld [vmem:[#allocation5 + $0xf8] sm:$0xff]
    %75 = vmatprep.subr.mxu0 0.0
    %76 = vmatpush1.msra.mxu0 %v43
    %77 = vmatprep.subr.mxu0 0.0
    %78 = vmatpush1.msra.mxu0 %v44
    %79 = vmatprep.subr.mxu0 0.0
    %80 = vmatpush1.msra.mxu0 %v45
    %81 = vmatprep.subr.mxu0 0.0
    %82 = vmatpush1.msra.mxu0 %v46
    %83 = vmatprep.subr.mxu0 0.0
    %84 = vmatpush1.msra.mxu0 %v47
    %85 = vmatprep.subr.mxu0 0.0
    %86 = vmatpush1.msra.mxu0 %v48
    %87 = vmatprep.subr.mxu0 0.0
    %88 = vmatpush1.msra.mxu0 %v49
    %89 = vmatprep.subr.mxu0 0.0
    %90 = vmatpush1.msra.mxu0 %v50
    %91 = vmatprep.subr.mxu0 0.0
    %92 = vmatpush1.msra.mxu0 %v51
    %93 = vmatprep.subr.mxu0 0.0
    %94 = vmatpush1.msra.mxu0 %v52
    %95 = vmatprep.subr.mxu0 0.0
    %96 = vmatpush1.msra.mxu0 %v53
    %97 = vmatprep.subr.mxu0 0.0
    %98 = vmatpush1.msra.mxu0 %v54
    %99 = vmatprep.subr.mxu0 0.0
    %100 = vmatpush1.msra.mxu0 %v55
    %101 = vmatprep.subr.mxu0 0.0
    %102 = vmatpush1.msra.mxu0 %v56
    %103 = vmatprep.subr.mxu0 0.0
    %104 = vmatpush1.msra.mxu0 %v57
    %105 = vmatprep.subr.mxu0 0.0
    %106 = vmatpush1.msra.mxu0 %v58
    %107 = vmatprep.subr.mxu0 0.0
    %108 = vmatpush1.msra.mxu0 %v59
    %109 = vmatprep.subr.mxu0 0.0
    %110 = vmatpush1.msra.mxu0 %v60
    %111 = vmatprep.subr.mxu0 0.0
    %112 = vmatpush1.msra.mxu0 %v61
    %113 = vmatprep.subr.mxu0 0.0
    %114 = vmatpush1.msra.mxu0 %v62
    %115 = vmatprep.subr.mxu0 0.0
    %116 = vmatpush1.msra.mxu0 %v63
    %117 = vmatprep.subr.mxu0 0.0
    %118 = vmatpush1.msra.mxu0 %v64
    %119 = vmatprep.subr.mxu0 0.0
    %120 = vmatpush1.msra.mxu0 %v65
    %121 = vmatprep.subr.mxu0 0.0
    %122 = vmatpush1.msra.mxu0 %v66
    %123 = vmatprep.subr.mxu0 0.0
    %124 = vmatpush1.msra.mxu0 %v67
    %125 = vmatprep.subr.mxu0 0.0
    %126 = vmatpush1.msra.mxu0 %v68
    %127 = vmatprep.subr.mxu0 0.0
    %128 = vmatpush1.msra.mxu0 %v69
    %129 = vmatprep.subr.mxu0 0.0
    %130 = vmatpush1.msra.mxu0 %v70
    %131 = vmatprep.subr.mxu0 0.0
    %132 = vmatpush1.msra.mxu0 %v71
    %133 = vmatprep.subr.mxu0 0.0
    %134 = vmatpush1.msra.mxu0 %v72
    %135 = vmatprep.subr.mxu0 0.0
    %136 = vmatpush1.msra.mxu0 %v73
    %137 = vmatprep.subr.mxu0 0.0
    %138 = vmatpush1.msra.mxu0 %v74
    %139 = vmatprep.mubr.f32.mxu0 %v42
    %140 = vmatmul.mubr.f32.gmra.mrb[0].mxu0 %v41
    %v141 = vpop.f32.mrb[0].mxu0
    %v142 = vadd.f32 0.0, %v141
    %v143 = vpop.f32.mrb[0].mxu0
    %144 = vdwg.mxu0
    %v145 = vld [vmem:[%s2] sm:$0x1]
    %v147 = vlaneseq
    %v148 = vshrl.u32 %v147, 7
    %v149 = vsub.s32 0, %v148
    %v150 = vrot.slane %v145, %v149
    %v152 = vadd.f32 %v142, %v150
    %vm153 = vcmask 80896
    %154 = vst.msk [vmem:[#allocation7] sm:$0xff] %vm153, %v152
    // Predicated region
    $region22: #{tpu_custom_call.1} parent=1 // pred_check
      _
    $region23: #{tpu_custom_call.1} parent=1 // pred_check_branch
      %156 = sbr.rel (0) target = $region25
    $region24: #{tpu_custom_call.1} parent=1 // pred_region
      %s158 = ssub.s32 128, 128
      %159 = vsyncadd [#allocation4], %s158
      %s161 = sshll.u32 [#allocation7], 4
      %s162 = int_to_ptr.vmem [resolvable:$true] %s161
      %164 = dma.vmem_to_hbm [thread:$0]  %s162, 128, %s3, [#allocation4]
    $region25: #{tpu_custom_call.1} parent=1 // pred_fallthru
      _
    // Predicated region
    $region26: #{tpu_custom_call.1} parent=1 // pred_check
      _
    $region27: #{tpu_custom_call.1} parent=1 // pred_check_branch
      %166 = sbr.rel (0) target = $region29
    $region28: #{tpu_custom_call.1} parent=1 // pred_region
      %167 = dma.done [#allocation4], 128
    $region29: #{tpu_custom_call.1} parent=1 // pred_fallthru
      _
    %168 = vsyncpa [#allocation3], 1
    %169 = vsyncpa [#allocation6], 1
    %170 = vsyncpa [#allocation4], 1

</llo_original>
